<compile_context>
chip_gen: v6e
topology: v6e:2x2x1
jax: 0.10.0
libtpu: 0.0.40
codegen_flags: <defaults>
</compile_context>

<pallas_src>
import math

import jax
import jax.numpy as jnp
import numpy as np
from jax import lax
from jax.experimental import pallas as pl
from jax.experimental.pallas import tpu as pltpu

# ---------------- config (small, consistent with BertLayer) ----------------
B = 2          # batch
S = 8          # sequence length
H = 32         # hidden_size
NH = 4         # num_attention_heads
HD = H // NH   # attention_head_size
I = 64         # intermediate_size
EPS = 1e-12    # layer_norm_eps (BERT default)

F = NH * S             # lane-dense (head, key) width for logits / probs
PACK = 3 * H + 2 * F   # useful lanes in the packed output slab
OUT_W = 256            # packed output slab width (multiple of 128 lanes)
VEC_W = 128            # bias / LayerNorm slab width (multiple of 128 lanes)


# ------------------------------- kernel ------------------------------------
def _bert_layer_kernel(x_ref, mask_ref, wqkvo_ref, wi_ref, wo2_ref, vec_ref,
                       out_ref):
    f32 = jnp.float32

    x = x_ref[...]           # (B*S, H)   flattened tokens
    mask = mask_ref[...]     # (B, S)     additive attention mask (per key)
    wqkvo = wqkvo_ref[...]   # (H, 4H)    [Wq | Wk | Wv | Wo]
    vecs = vec_ref[...]      # (8, VEC_W) packed bias / LayerNorm rows

    b_qkv = vecs[0:1, :3 * H]
    bo    = vecs[1:2, :H]
    g1    = vecs[2:3, :H]
    be1   = vecs[3:4, :H]
    bi    = vecs[4:5, :I]
    bo2   = vecs[5:6, :H]
    g2    = vecs[6:7, :H]
    be2   = vecs[7:8, :H]

    def layer_norm(y, gamma, beta):
        mu = jnp.mean(y, axis=-1, keepdims=True)
        var = jnp.mean((y - mu) ** 2, axis=-1, keepdims=True)
        return (y - mu) * lax.rsqrt(var + EPS) * gamma + beta

    # --- BertSelfAttention: fused Q/K/V projection (one MXU pass, all tokens) ---
    qkv = jnp.dot(x, wqkvo[:, :3 * H], preferred_element_type=f32) + b_qkv  # (B*S, 3H)
    q = qkv[:, 0:H].reshape(B, S, H)
    k = qkv[:, H:2 * H].reshape(B, S, H)
    v = qkv[:, 2 * H:3 * H].reshape(B, S, H)

    # Block-diagonal head selection: row f = h*S + key, column e = (h', d).
    # head_sel[f, e] = 1 iff e belongs to head h (built from iota + compares).
    row_head = lax.broadcasted_iota(jnp.int32, (NH, S, H), 0).reshape(F, H)
    e_idx = lax.broadcasted_iota(jnp.int32, (F, H), 1)
    head_sel = jnp.where(
        (e_idx >= row_head * HD) & (e_idx < (row_head + 1) * HD), 1.0, 0.0
    ).astype(f32)                                                   # (F, H)

    # Expanded K/V: k_exp[b, h*S + key, :] keeps only head h's lanes of k[b, key, :]
    k_exp = jnp.concatenate([k] * NH, axis=1) * head_sel[None]      # (B, F, H)
    v_exp = jnp.concatenate([v] * NH, axis=1) * head_sel[None]      # (B, F, H)

    # Raw scores for ALL heads in one batched contraction, directly lane-dense:
    # logits[b, q, h*S + key] = sum_d q[b, q, (h, d)] * k[b, key, (h, d)]
    logits = jnp.einsum('bqe,bfe->bqf', q, k_exp,
                        preferred_element_type=f32)                 # (B, S, F)

    # Mask: broadcast (B, S) -> lane-dense (B, F) once, hoisted (lane (h,k) gets key k's mask)
    mask_dense = jnp.concatenate([mask] * NH, axis=-1)              # (B, F)
    s = logits * (1.0 / math.sqrt(HD)) + mask_dense[:, None, :]
    # Row max over all heads is constant in the key index -> softmax is unchanged.
    s = s - jnp.max(s, axis=-1, keepdims=True)
    e = jnp.exp(s)                                                  # (B, S, F)

    # Per-head denominators via one block-of-ones matmul (no lane reshapes),
    # then exact reciprocal (keeps the 1e-4 tolerance) + broadcast multiply.
    rh_g = lax.broadcasted_iota(jnp.int32, (NH, S, F), 0).reshape(F, F)
    g_idx = lax.broadcasted_iota(jnp.int32, (F, F), 1)
    g_sum = jnp.where(
        (g_idx >= rh_g * S) & (g_idx < (rh_g + 1) * S), 1.0, 0.0
    ).astype(f32)                                                   # (F, F)

    e2 = e.reshape(B * S, F)
    denom = jnp.dot(e2, g_sum, preferred_element_type=f32)          # (B*S, F)
    probs2 = e2 * pl.reciprocal(denom, approx=False)                # (B*S, F)
    probs = probs2.reshape(B, S, F)

    # Context for all heads at once; lanes come out already head-concatenated (h, d)
    ctx = jnp.einsum('bqf,bfe->bqe', probs, v_exp,
                     preferred_element_type=f32)                    # (B, S, H)

    # --- BertSelfOutput: single full-K Wo projection + bias + residual + LN ---
    attn_acc = (jnp.dot(ctx.reshape(B * S, H), wqkvo[:, 3 * H:],
                        preferred_element_type=f32) + bo + x)
    attn_output = layer_norm(attn_acc, g1, be1)                     # (B*S, H)

    # --- BertIntermediate: dense + exact erf GELU ---
    inter = jnp.dot(attn_output, wi_ref[...], preferred_element_type=f32) + bi
    inter = 0.5 * inter * (1.0 + lax.erf(inter * (1.0 / math.sqrt(2.0))))

    # --- BertOutput: dense (layer_output1) + residual + LN (layer_output2) ---
    lo1 = jnp.dot(inter, wo2_ref[...], preferred_element_type=f32) + bo2
    lo2 = layer_norm(lo1 + attn_output, g2, be2)

    # --- single lane-dense packed output store: (B*S, 256), one full-block vst ---
    logits2 = logits.reshape(B * S, F)
    pad = jnp.zeros((B * S, OUT_W - PACK), f32)
    out_ref[...] = jnp.concatenate(
        [attn_output, lo2, lo1, logits2, probs2, pad], axis=-1)


# ------------------------------- wrapper ------------------------------------
def bert_layer_forward(x, mask_bs, params):
    """x: (B,S,H) f32; mask_bs: (B,S) additive mask; params: 16 arrays
    (wq,bq,wk,bk,wv,bv,wo,bo,g1,be1,wi,bi,wo2,bo2,g2,be2), weights [in,out],
    vectors 1-D.  Returns module-layout outputs."""
    (wq, bq, wk, bk, wv, bv, wo, bo, g1, be1,
     wi, bi, wo2, bo2, g2, be2) = params

    # ---- host-side parameter packing (free XLA ops) ----
    w_qkvo = jnp.concatenate([wq, wk, wv, wo], axis=1)       # (H, 4H) = (32, 128)
    b_qkv = jnp.concatenate([bq, bk, bv], axis=0)            # (3H,)

    def row(vv):
        return jnp.pad(vv, (0, VEC_W - vv.shape[0]))[None, :]

    vec_slab = jnp.concatenate(
        [row(b_qkv), row(bo), row(g1), row(be1),
         row(bi), row(bo2), row(g2), row(be2)], axis=0)      # (8, 128) lane-aligned

    x_flat = x.reshape(B * S, H)

    slab = pl.pallas_call(
        _bert_layer_kernel,
        out_shape=jax.ShapeDtypeStruct((B * S, OUT_W), jnp.float32),
        in_specs=[pl.BlockSpec(memory_space=pltpu.MemorySpace.VMEM)] * 6,
        out_specs=pl.BlockSpec(memory_space=pltpu.MemorySpace.VMEM),
        compiler_params=pltpu.CompilerParams(vmem_limit_bytes=32 * 1024 * 1024),
    )(x_flat, mask_bs, w_qkvo, wi, wo2, vec_slab)

    # split the packed slab back into module layouts (free in XLA, outside kernel)
    attn_out = slab[:, 0:H].reshape(B, S, H)
    lo2 = slab[:, H:2 * H].reshape(B, S, H)
    lo1 = slab[:, 2 * H:3 * H].reshape(B, S, H)
    logits = slab[:, 3 * H:3 * H + F].reshape(B, S, NH, S).transpose(0, 2, 1, 3)
    probs = slab[:, 3 * H + F:3 * H + 2 * F].reshape(B, S, NH, S).transpose(0, 2, 1, 3)
    return attn_out, lo2, lo1, logits, probs


# ------------------------- pure-JAX reference -------------------------------
def bert_layer_reference(x, mask_b11s, params):
    (wq, bq, wk, bk, wv, bv, wo, bo, g1, be1,
     wi, bi, wo2, bo2, g2, be2) = params
    q = x @ wq + bq
    k = x @ wk + bk
    v = x @ wv + bv

    def split_heads(t):  # (B,S,H) -> (B,NH,S,HD)
        return t.reshape(B, S, NH, HD).transpose(0, 2, 1, 3)

    qh, kh, vh = split_heads(q), split_heads(k), split_heads(v)
    logits = jnp.einsum("bhqd,bhkd->bhqk", qh, kh)
    scores = logits / math.sqrt(HD) + mask_b11s
    probs = jax.nn.softmax(scores, axis=-1)
    ctx = jnp.einsum("bhqk,bhkd->bhqd", probs, vh)
    ctx = ctx.transpose(0, 2, 1, 3).reshape(B, S, H)

    def ln(y, g, b):
        mu = jnp.mean(y, -1, keepdims=True)
        var = jnp.mean((y - mu) ** 2, -1, keepdims=True)
        return (y - mu) / jnp.sqrt(var + EPS) * g + b

    attn_out = ln(ctx @ wo + bo + x, g1, be1)
    inter = attn_out @ wi + bi
    inter = 0.5 * inter * (1.0 + jax.lax.erf(inter / math.sqrt(2.0)))
    lo1 = inter @ wo2 + bo2
    lo2 = ln(lo1 + attn_out, g2, be2)
    return attn_out, lo2, lo1, logits, probs


# --------------------------------- main -------------------------------------
if __name__ == "__main__":
    key = jax.random.PRNGKey(0)
    ks = jax.random.split(key, 16)

    def dense(kw, din, dout):
        return 0.02 * jax.random.normal(kw, (din, dout), jnp.float32)

    def vec(kv, d):
        return 0.02 * jax.random.normal(kv, (d,), jnp.float32)

    # deterministic parameter init (shapes from BertLayer.__init__)
    wq = dense(ks[0], H, H); bq = vec(ks[1], H)
    wk = dense(ks[2], H, H); bk = vec(ks[3], H)
    wv = dense(ks[4], H, H); bv = vec(ks[5], H)
    wo = dense(ks[6], H, H); bo = vec(ks[7], H)
    g1 = jnp.ones((H,), jnp.float32); be1 = jnp.zeros((H,), jnp.float32)
    wi = dense(ks[8], H, I); bi = vec(ks[9], I)
    wo2 = dense(ks[10], I, H); bo2 = vec(ks[11], H)
    g2 = jnp.ones((H,), jnp.float32); be2 = jnp.zeros((H,), jnp.float32)
    params = [wq, bq, wk, bk, wv, bv, wo, bo, g1, be1,
              wi, bi, wo2, bo2, g2, be2]

    x = jax.random.normal(ks[12], (B, S, H), jnp.float32)

    # additive attention mask: mask out last 2 keys of batch 1
    mask_bs = jnp.zeros((B, S), jnp.float32)
    mask_bs = mask_bs.at[1, -2:].set(-10000.0)
    mask_b11s = mask_bs[:, None, None, :]    # (B,1,1,S) for the reference

    outs = bert_layer_forward(x, mask_bs, params)
    outs = jax.block_until_ready(outs)

    refs = bert_layer_reference(x, mask_b11s, params)
    names = ["attention_output", "layer_output2", "layer_output1",
             "attn_logits", "attn_probs"]
    for name, o, r in zip(names, outs, refs):
        np.testing.assert_allclose(np.asarray(o), np.asarray(r),
                                   rtol=1e-4, atol=1e-4, err_msg=name)

    print("KERNEL_OK")
</pallas_src>

<mosaic_0001>
module attributes {stable_mosaic.version = 11 : i64} {
  func.func @_bert_layer_kernel(%arg0: memref<16x32xf32, #tpu.memory_space<vmem>>, %arg1: memref<2x8xf32, #tpu.memory_space<vmem>>, %arg2: memref<32x128xf32, #tpu.memory_space<vmem>>, %arg3: memref<32x64xf32, #tpu.memory_space<vmem>>, %arg4: memref<64x32xf32, #tpu.memory_space<vmem>>, %arg5: memref<8x128xf32, #tpu.memory_space<vmem>>, %arg6: memref<16x256xf32, #tpu.memory_space<vmem>>) attributes {dimension_semantics = [], scalar_prefetch = 0 : i64, scratch_operands = 0 : i64, tpu.core_type = #tpu.core_type<tc>} {
    %c0 = arith.constant 0 : index
    %c0_0 = arith.constant 0 : index
    %0 = vector.load %arg0[%c0, %c0_0] : memref<16x32xf32, #tpu.memory_space<vmem>>, vector<16x32xf32>
    %c0_1 = arith.constant 0 : index
    %c0_2 = arith.constant 0 : index
    %1 = vector.load %arg1[%c0_1, %c0_2] : memref<2x8xf32, #tpu.memory_space<vmem>>, vector<2x8xf32>
    %c0_3 = arith.constant 0 : index
    %c0_4 = arith.constant 0 : index
    %2 = vector.load %arg2[%c0_3, %c0_4] : memref<32x128xf32, #tpu.memory_space<vmem>>, vector<32x128xf32>
    %c0_5 = arith.constant 0 : index
    %c0_6 = arith.constant 0 : index
    %3 = vector.load %arg5[%c0_5, %c0_6] : memref<8x128xf32, #tpu.memory_space<vmem>>, vector<8x128xf32>
    %4 = vector.extract_strided_slice %3 {offsets = [0, 0], sizes = [1, 96], strides = [1, 1]} : vector<8x128xf32> to vector<1x96xf32>
    %5 = vector.extract_strided_slice %3 {offsets = [1, 0], sizes = [1, 32], strides = [1, 1]} : vector<8x128xf32> to vector<1x32xf32>
    %6 = vector.extract_strided_slice %3 {offsets = [2, 0], sizes = [1, 32], strides = [1, 1]} : vector<8x128xf32> to vector<1x32xf32>
    %7 = vector.extract_strided_slice %3 {offsets = [3, 0], sizes = [1, 32], strides = [1, 1]} : vector<8x128xf32> to vector<1x32xf32>
    %8 = vector.extract_strided_slice %3 {offsets = [4, 0], sizes = [1, 64], strides = [1, 1]} : vector<8x128xf32> to vector<1x64xf32>
    %9 = vector.extract_strided_slice %3 {offsets = [5, 0], sizes = [1, 32], strides = [1, 1]} : vector<8x128xf32> to vector<1x32xf32>
    %10 = vector.extract_strided_slice %3 {offsets = [6, 0], sizes = [1, 32], strides = [1, 1]} : vector<8x128xf32> to vector<1x32xf32>
    %11 = vector.extract_strided_slice %3 {offsets = [7, 0], sizes = [1, 32], strides = [1, 1]} : vector<8x128xf32> to vector<1x32xf32>
    %12 = vector.extract_strided_slice %2 {offsets = [0, 0], sizes = [32, 96], strides = [1, 1]} : vector<32x128xf32> to vector<32x96xf32>
    %cst = arith.constant dense<0.000000e+00> : vector<16x96xf32>
    %13 = tpu.matmul %0, %12, %cst {dimension_numbers = #tpu.dot_dimension_numbers<[1], [0], [0], [1], [0, 0, 1, 1], [], []>} : vector<16x32xf32>, vector<32x96xf32>, vector<16x96xf32> -> vector<16x96xf32>
    %14 = vector.broadcast %4 : vector<1x96xf32> to vector<16x96xf32>
    %15 = arith.addf %13, %14 : vector<16x96xf32>
    %16 = vector.extract_strided_slice %15 {offsets = [0, 0], sizes = [16, 32], strides = [1, 1]} : vector<16x96xf32> to vector<16x32xf32>
    %17 = vector.shape_cast %16 : vector<16x32xf32> to vector<2x8x32xf32>
    %18 = vector.extract_strided_slice %15 {offsets = [0, 32], sizes = [16, 32], strides = [1, 1]} : vector<16x96xf32> to vector<16x32xf32>
    %19 = vector.shape_cast %18 : vector<16x32xf32> to vector<2x8x32xf32>
    %20 = vector.extract_strided_slice %15 {offsets = [0, 64], sizes = [16, 32], strides = [1, 1]} : vector<16x96xf32> to vector<16x32xf32>
    %21 = vector.shape_cast %20 : vector<16x32xf32> to vector<2x8x32xf32>
    %22 = tpu.iota {dimensions = array<i32: 0>} : vector<4x8x32xi32>
    %23 = vector.shape_cast %22 : vector<4x8x32xi32> to vector<32x32xi32>
    %24 = tpu.iota {dimensions = array<i32: 1>} : vector<32x32xi32>
    %c8_i32 = arith.constant 8 : i32
    %25 = vector.broadcast %c8_i32 : i32 to vector<32x32xi32>
    %26 = arith.muli %23, %25 : vector<32x32xi32>
    %27 = arith.cmpi sge, %24, %26 : vector<32x32xi32>
    %c1_i32 = arith.constant 1 : i32
    %28 = vector.broadcast %c1_i32 : i32 to vector<32x32xi32>
    %29 = arith.addi %23, %28 : vector<32x32xi32>
    %c8_i32_7 = arith.constant 8 : i32
    %30 = vector.broadcast %c8_i32_7 : i32 to vector<32x32xi32>
    %31 = arith.muli %29, %30 : vector<32x32xi32>
    %32 = arith.cmpi slt, %24, %31 : vector<32x32xi32>
    %33 = arith.andi %27, %32 : vector<32x32xi1>
    %cst_8 = arith.constant 1.000000e+00 : f32
    %cst_9 = arith.constant 0.000000e+00 : f32
    %34 = vector.broadcast %cst_8 : f32 to vector<32x32xf32>
    %35 = vector.broadcast %cst_9 : f32 to vector<32x32xf32>
    %36 = arith.select %33, %34, %35 : vector<32x32xi1>, vector<32x32xf32>
    %37 = tpu.concatenate %19, %19, %19, %19 in 1 : vector<2x8x32xf32>, vector<2x8x32xf32>, vector<2x8x32xf32>, vector<2x8x32xf32> -> vector<2x32x32xf32>
    %38 = vector.shape_cast %36 : vector<32x32xf32> to vector<1x32x32xf32>
    %39 = vector.broadcast %38 : vector<1x32x32xf32> to vector<2x32x32xf32>
    %40 = arith.mulf %37, %39 : vector<2x32x32xf32>
    %41 = tpu.concatenate %21, %21, %21, %21 in 1 : vector<2x8x32xf32>, vector<2x8x32xf32>, vector<2x8x32xf32>, vector<2x8x32xf32> -> vector<2x32x32xf32>
    %42 = vector.shape_cast %36 : vector<32x32xf32> to vector<1x32x32xf32>
    %43 = vector.broadcast %42 : vector<1x32x32xf32> to vector<2x32x32xf32>
    %44 = arith.mulf %41, %43 : vector<2x32x32xf32>
    "tpu.trace_start"() <{level = 10 : i32, message = "bqe,bfe->bqf"}> : () -> ()
    %cst_10 = arith.constant dense<0.000000e+00> : vector<2x8x32xf32>
    %45 = tpu.matmul %17, %40, %cst_10 {dimension_numbers = #tpu.dot_dimension_numbers<[2], [2], [1], [1], [0, 0, 0, 1, 1, 1], [0], [0]>} : vector<2x8x32xf32>, vector<2x32x32xf32>, vector<2x8x32xf32> -> vector<2x8x32xf32>
    "tpu.trace_stop"() : () -> ()
    %46 = tpu.concatenate %1, %1, %1, %1 in 1 : vector<2x8xf32>, vector<2x8xf32>, vector<2x8xf32>, vector<2x8xf32> -> vector<2x32xf32>
    %cst_11 = arith.constant 0.353553385 : f32
    %47 = vector.broadcast %cst_11 : f32 to vector<2x8x32xf32>
    %48 = arith.mulf %45, %47 : vector<2x8x32xf32>
    %49 = vector.shape_cast %46 : vector<2x32xf32> to vector<2x1x32xf32>
    %50 = vector.broadcast %49 : vector<2x1x32xf32> to vector<2x8x32xf32>
    %51 = arith.addf %48, %50 : vector<2x8x32xf32>
    %cst_12 = arith.constant dense<0xFF800000> : vector<2x8xf32>
    %52 = vector.multi_reduction <maximumf>, %51, %cst_12 [2] : vector<2x8x32xf32> to vector<2x8xf32>
    %53 = vector.shape_cast %52 : vector<2x8xf32> to vector<2x8x1xf32>
    %54 = vector.broadcast %53 : vector<2x8x1xf32> to vector<2x8x32xf32>
    %55 = arith.subf %51, %54 : vector<2x8x32xf32>
    %56 = math.exp %55 : vector<2x8x32xf32>
    %57 = tpu.iota {dimensions = array<i32: 0>} : vector<4x8x32xi32>
    %58 = vector.shape_cast %57 : vector<4x8x32xi32> to vector<32x32xi32>
    %59 = tpu.iota {dimensions = array<i32: 1>} : vector<32x32xi32>
    %c8_i32_13 = arith.constant 8 : i32
    %60 = vector.broadcast %c8_i32_13 : i32 to vector<32x32xi32>
    %61 = arith.muli %58, %60 : vector<32x32xi32>
    %62 = arith.cmpi sge, %59, %61 : vector<32x32xi32>
    %c1_i32_14 = arith.constant 1 : i32
    %63 = vector.broadcast %c1_i32_14 : i32 to vector<32x32xi32>
    %64 = arith.addi %58, %63 : vector<32x32xi32>
    %c8_i32_15 = arith.constant 8 : i32
    %65 = vector.broadcast %c8_i32_15 : i32 to vector<32x32xi32>
    %66 = arith.muli %64, %65 : vector<32x32xi32>
    %67 = arith.cmpi slt, %59, %66 : vector<32x32xi32>
    %68 = arith.andi %62, %67 : vector<32x32xi1>
    %cst_16 = arith.constant 1.000000e+00 : f32
    %cst_17 = arith.constant 0.000000e+00 : f32
    %69 = vector.broadcast %cst_16 : f32 to vector<32x32xf32>
    %70 = vector.broadcast %cst_17 : f32 to vector<32x32xf32>
    %71 = arith.select %68, %69, %70 : vector<32x32xi1>, vector<32x32xf32>
    %72 = vector.shape_cast %56 : vector<2x8x32xf32> to vector<16x32xf32>
    %cst_18 = arith.constant dense<0.000000e+00> : vector<16x32xf32>
    %73 = tpu.matmul %72, %71, %cst_18 {dimension_numbers = #tpu.dot_dimension_numbers<[1], [0], [0], [1], [0, 0, 1, 1], [], []>} : vector<16x32xf32>, vector<32x32xf32>, vector<16x32xf32> -> vector<16x32xf32>
    %74 = tpu.reciprocal %73 : vector<16x32xf32> -> vector<16x32xf32>
    %75 = arith.mulf %72, %74 : vector<16x32xf32>
    %76 = vector.shape_cast %75 : vector<16x32xf32> to vector<2x8x32xf32>
    "tpu.trace_start"() <{level = 10 : i32, message = "bqf,bfe->bqe"}> : () -> ()
    %cst_19 = arith.constant dense<0.000000e+00> : vector<2x8x32xf32>
    %77 = tpu.matmul %76, %44, %cst_19 {dimension_numbers = #tpu.dot_dimension_numbers<[2], [1], [1], [2], [0, 0, 0, 1, 1, 2], [0], [0]>} : vector<2x8x32xf32>, vector<2x32x32xf32>, vector<2x8x32xf32> -> vector<2x8x32xf32>
    "tpu.trace_stop"() : () -> ()
    %78 = vector.shape_cast %77 : vector<2x8x32xf32> to vector<16x32xf32>
    %79 = vector.extract_strided_slice %2 {offsets = [0, 96], sizes = [32, 32], strides = [1, 1]} : vector<32x128xf32> to vector<32x32xf32>
    %cst_20 = arith.constant dense<0.000000e+00> : vector<16x32xf32>
    %80 = tpu.matmul %78, %79, %cst_20 {dimension_numbers = #tpu.dot_dimension_numbers<[1], [0], [0], [1], [0, 0, 1, 1], [], []>} : vector<16x32xf32>, vector<32x32xf32>, vector<16x32xf32> -> vector<16x32xf32>
    %81 = vector.broadcast %5 : vector<1x32xf32> to vector<16x32xf32>
    %82 = arith.addf %80, %81 : vector<16x32xf32>
    %83 = arith.addf %82, %0 : vector<16x32xf32>
    %cst_21 = arith.constant dense<0.000000e+00> : vector<16xf32>
    %84 = vector.multi_reduction <add>, %83, %cst_21 [1] : vector<16x32xf32> to vector<16xf32>
    %85 = vector.shape_cast %84 : vector<16xf32> to vector<16x1xf32>
    %cst_22 = arith.constant 3.200000e+01 : f32
    %86 = vector.broadcast %cst_22 : f32 to vector<16x1xf32>
    %87 = arith.divf %85, %86 : vector<16x1xf32>
    %88 = vector.broadcast %87 : vector<16x1xf32> to vector<16x32xf32>
    %89 = arith.subf %83, %88 : vector<16x32xf32>
    %90 = arith.mulf %89, %89 : vector<16x32xf32>
    %cst_23 = arith.constant dense<0.000000e+00> : vector<16xf32>
    %91 = vector.multi_reduction <add>, %90, %cst_23 [1] : vector<16x32xf32> to vector<16xf32>
    %92 = vector.shape_cast %91 : vector<16xf32> to vector<16x1xf32>
    %cst_24 = arith.constant 3.200000e+01 : f32
    %93 = vector.broadcast %cst_24 : f32 to vector<16x1xf32>
    %94 = arith.divf %92, %93 : vector<16x1xf32>
    %95 = vector.broadcast %87 : vector<16x1xf32> to vector<16x32xf32>
    %96 = arith.subf %83, %95 : vector<16x32xf32>
    %cst_25 = arith.constant 9.99999996E-13 : f32
    %97 = vector.broadcast %cst_25 : f32 to vector<16x1xf32>
    %98 = arith.addf %94, %97 : vector<16x1xf32>
    %99 = math.rsqrt %98 : vector<16x1xf32>
    %100 = vector.broadcast %99 : vector<16x1xf32> to vector<16x32xf32>
    %101 = arith.mulf %96, %100 : vector<16x32xf32>
    %102 = vector.broadcast %6 : vector<1x32xf32> to vector<16x32xf32>
    %103 = arith.mulf %101, %102 : vector<16x32xf32>
    %104 = vector.broadcast %7 : vector<1x32xf32> to vector<16x32xf32>
    %105 = arith.addf %103, %104 : vector<16x32xf32>
    %c0_26 = arith.constant 0 : index
    %c0_27 = arith.constant 0 : index
    %106 = vector.load %arg3[%c0_26, %c0_27] : memref<32x64xf32, #tpu.memory_space<vmem>>, vector<32x64xf32>
    %cst_28 = arith.constant dense<0.000000e+00> : vector<16x64xf32>
    %107 = tpu.matmul %105, %106, %cst_28 {dimension_numbers = #tpu.dot_dimension_numbers<[1], [0], [0], [1], [0, 0, 1, 1], [], []>} : vector<16x32xf32>, vector<32x64xf32>, vector<16x64xf32> -> vector<16x64xf32>
    %108 = vector.broadcast %8 : vector<1x64xf32> to vector<16x64xf32>
    %109 = arith.addf %107, %108 : vector<16x64xf32>
    %cst_29 = arith.constant 5.000000e-01 : f32
    %110 = vector.broadcast %cst_29 : f32 to vector<16x64xf32>
    %111 = arith.mulf %110, %109 : vector<16x64xf32>
    %cst_30 = arith.constant 0.707106769 : f32
    %112 = vector.broadcast %cst_30 : f32 to vector<16x64xf32>
    %113 = arith.mulf %109, %112 : vector<16x64xf32>
    %114 = math.erf %113 : vector<16x64xf32>
    %cst_31 = arith.constant 1.000000e+00 : f32
    %115 = vector.broadcast %cst_31 : f32 to vector<16x64xf32>
    %116 = arith.addf %115, %114 : vector<16x64xf32>
    %117 = arith.mulf %111, %116 : vector<16x64xf32>
    %c0_32 = arith.constant 0 : index
    %c0_33 = arith.constant 0 : index
    %118 = vector.load %arg4[%c0_32, %c0_33] : memref<64x32xf32, #tpu.memory_space<vmem>>, vector<64x32xf32>
    %cst_34 = arith.constant dense<0.000000e+00> : vector<16x32xf32>
    %119 = tpu.matmul %117, %118, %cst_34 {dimension_numbers = #tpu.dot_dimension_numbers<[1], [0], [0], [1], [0, 0, 1, 1], [], []>} : vector<16x64xf32>, vector<64x32xf32>, vector<16x32xf32> -> vector<16x32xf32>
    %120 = vector.broadcast %9 : vector<1x32xf32> to vector<16x32xf32>
    %121 = arith.addf %119, %120 : vector<16x32xf32>
    %122 = arith.addf %121, %105 : vector<16x32xf32>
    %cst_35 = arith.constant dense<0.000000e+00> : vector<16xf32>
    %123 = vector.multi_reduction <add>, %122, %cst_35 [1] : vector<16x32xf32> to vector<16xf32>
    %124 = vector.shape_cast %123 : vector<16xf32> to vector<16x1xf32>
    %cst_36 = arith.constant 3.200000e+01 : f32
    %125 = vector.broadcast %cst_36 : f32 to vector<16x1xf32>
    %126 = arith.divf %124, %125 : vector<16x1xf32>
    %127 = vector.broadcast %126 : vector<16x1xf32> to vector<16x32xf32>
    %128 = arith.subf %122, %127 : vector<16x32xf32>
    %129 = arith.mulf %128, %128 : vector<16x32xf32>
    %cst_37 = arith.constant dense<0.000000e+00> : vector<16xf32>
    %130 = vector.multi_reduction <add>, %129, %cst_37 [1] : vector<16x32xf32> to vector<16xf32>
    %131 = vector.shape_cast %130 : vector<16xf32> to vector<16x1xf32>
    %cst_38 = arith.constant 3.200000e+01 : f32
    %132 = vector.broadcast %cst_38 : f32 to vector<16x1xf32>
    %133 = arith.divf %131, %132 : vector<16x1xf32>
    %134 = vector.broadcast %126 : vector<16x1xf32> to vector<16x32xf32>
    %135 = arith.subf %122, %134 : vector<16x32xf32>
    %cst_39 = arith.constant 9.99999996E-13 : f32
    %136 = vector.broadcast %cst_39 : f32 to vector<16x1xf32>
    %137 = arith.addf %133, %136 : vector<16x1xf32>
    %138 = math.rsqrt %137 : vector<16x1xf32>
    %139 = vector.broadcast %138 : vector<16x1xf32> to vector<16x32xf32>
    %140 = arith.mulf %135, %139 : vector<16x32xf32>
    %141 = vector.broadcast %10 : vector<1x32xf32> to vector<16x32xf32>
    %142 = arith.mulf %140, %141 : vector<16x32xf32>
    %143 = vector.broadcast %11 : vector<1x32xf32> to vector<16x32xf32>
    %144 = arith.addf %142, %143 : vector<16x32xf32>
    %145 = vector.shape_cast %45 : vector<2x8x32xf32> to vector<16x32xf32>
    %cst_40 = arith.constant 0.000000e+00 : f32
    %146 = vector.broadcast %cst_40 : f32 to vector<16x96xf32>
    %147 = tpu.concatenate %105, %144, %121, %145, %75, %146 in 1 : vector<16x32xf32>, vector<16x32xf32>, vector<16x32xf32>, vector<16x32xf32>, vector<16x32xf32>, vector<16x96xf32> -> vector<16x256xf32>
    %c0_41 = arith.constant 0 : index
    %c0_42 = arith.constant 0 : index
    %148 = vector.load %arg6[%c0_41, %c0_42] : memref<16x256xf32, #tpu.memory_space<vmem>>, vector<16x256xf32>
    tpu.vector_store %arg6[%c0_41, %c0_42], %147 {strides = array<i32>} : memref<16x256xf32, #tpu.memory_space<vmem>>, vector<16x256xf32>,
    return
  }
}

</mosaic_0001>

<llo_original>
// kernel: tpu_custom_call.1
$region0: #{tpu_custom_call.1}
  #allocation0 [shape = 'u32[]', space=smem, size = 0x4, offset = 0x4, fixed_abs, tag = 'smem constant byte address 0x4 - core index']
  #allocation1 [shape = 'u32[144,128]{1,0:T(1,128)}', space=vmem, size = 0x12000, scoped, tag = 'internal scratch']
  %s0 = inlined_call_operand.vmem [shape: f32[16,32], index: 0, kind: input, shape index: {}]
  %s1 = inlined_call_operand.vmem [shape: f32[2,8], index: 1, kind: input, shape index: {}]
  %s2 = inlined_call_operand.vmem [shape: f32[32,128], index: 2, kind: input, shape index: {}]
  %s3 = inlined_call_operand.vmem [shape: f32[32,64], index: 3, kind: input, shape index: {}]
  %s4 = inlined_call_operand.vmem [shape: f32[64,32], index: 4, kind: input, shape index: {}]
  %s5 = inlined_call_operand.vmem [shape: f32[8,128], index: 5, kind: input, shape index: {}]
  %s6 = inlined_call_operand.hbm [shape: f32[16,256], index: 6, kind: output, shape index: {}]
  %s7 = sld [smem:[#allocation0]]
  $region34: #{tpu_custom_call.1} parent=0
    _
  %s9 = ssub.s32 1, %s7
  %s10 = scalar_select 0, %s9, %s7
  $region1: #{tpu_custom_call.1} parent=0
    #allocation2 [shape = 'u8[16384]{0}', space=vmem, size = 0x4000, scoped, tag = 'output window, operand 0, single buffered']
    #allocation3 [shape = 's32[1]{0}', space=sflag, size = 0x4, scoped, tag = 'scoped memory for tpu_custom_call.1']
    %11 = vsyncpa [#allocation3], 0
    // Predicated region
    $region2: #{tpu_custom_call.1} parent=1 // pred_check
      _
    $region3: #{tpu_custom_call.1} parent=1 // pred_check_branch
      %13 = sbr.rel (0) target = $region5
    $region4: #{tpu_custom_call.1} parent=1 // pred_region
      _
    $region5: #{tpu_custom_call.1} parent=1 // pred_fallthru
      _
    // Predicated region
    $region6: #{tpu_custom_call.1} parent=1 // pred_check
      _
    $region7: #{tpu_custom_call.1} parent=1 // pred_check_branch
      %15 = sbr.rel (0) target = $region9
    $region8: #{tpu_custom_call.1} parent=1 // pred_region
      _
    $region9: #{tpu_custom_call.1} parent=1 // pred_fallthru
      _
    // Predicated region
    $region10: #{tpu_custom_call.1} parent=1 // pred_check
      _
    $region11: #{tpu_custom_call.1} parent=1 // pred_check_branch
      %17 = sbr.rel (0) target = $region13
    $region12: #{tpu_custom_call.1} parent=1 // pred_region
      _
    $region13: #{tpu_custom_call.1} parent=1 // pred_fallthru
      _
    // Predicated region
    $region14: #{tpu_custom_call.1} parent=1 // pred_check
      _
    $region15: #{tpu_custom_call.1} parent=1 // pred_check_branch
      %19 = sbr.rel (0) target = $region17
    $region16: #{tpu_custom_call.1} parent=1 // pred_region
      _
    $region17: #{tpu_custom_call.1} parent=1 // pred_fallthru
      _
    // Predicated region
    $region18: #{tpu_custom_call.1} parent=1 // pred_check
      _
    $region19: #{tpu_custom_call.1} parent=1 // pred_check_branch
      %21 = sbr.rel (0) target = $region21
    $region20: #{tpu_custom_call.1} parent=1 // pred_region
      _
    $region21: #{tpu_custom_call.1} parent=1 // pred_fallthru
      _
    // Predicated region
    $region22: #{tpu_custom_call.1} parent=1 // pred_check
      _
    $region23: #{tpu_custom_call.1} parent=1 // pred_check_branch
      %23 = sbr.rel (0) target = $region25
    $region24: #{tpu_custom_call.1} parent=1 // pred_region
      _
    $region25: #{tpu_custom_call.1} parent=1 // pred_fallthru
      _
    %v24 = vld [vmem:[%s0] sm:$0xff]
    %v25 = vld [vmem:[%s0 + $0x8] sm:$0xff]
    %v26 = vld [vmem:[%s1] sm:$0x3]
    %v27 = vld [vmem:[%s2] sm:$0xff]
    %v28 = vld [vmem:[%s2 + $0x8] sm:$0xff]
    %v29 = vld [vmem:[%s2 + $0x10] sm:$0xff]
    %v30 = vld [vmem:[%s2 + $0x18] sm:$0xff]
    %v31 = vld [vmem:[%s5] sm:$0xff]
    %v32 = vlaneseq
    %v33 = vshrl.u32 %v32, 7
    %v34 = vsub.s32 0, %v33
    %v35 = vrot.slane %v31, %v34
    %vm36 = vcmask 261120
    %v38 = vsel %vm36, %v24, 0
    %v41 = vsel %vm36, %v25, 0
    %43 = vmatprep.subr.mxu0 0.0
    %44 = vmatpush1.msra.mxu0 0.0
    %45 = vmatprep.subr.mxu0 0.0
    %46 = vmatpush1.msra.mxu0 0.0
    %47 = vmatprep.subr.mxu0 0.0
    %48 = vmatpush1.msra.mxu0 0.0
    %49 = vmatprep.subr.mxu0 0.0
    %50 = vmatpush1.msra.mxu0 0.0
    %51 = vmatprep.subr.mxu0 0.0
    %52 = vmatpush1.msra.mxu0 0.0
    %53 = vmatprep.subr.mxu0 0.0
    %54 = vmatpush1.msra.mxu0 0.0
    %55 = vmatprep.subr.mxu0 0.0
    %56 = vmatpush1.msra.mxu0 0.0
    %57 = vmatprep.subr.mxu0 0.0
    %58 = vmatpush1.msra.mxu0 0.0
    %59 = vmatprep.subr.mxu0 0.0
    %60 = vmatpush1.msra.mxu0 0.0
    %61 = vmatprep.subr.mxu0 0.0
    %62 = vmatpush1.msra.mxu0 0.0
    %63 = vmatprep.subr.mxu0 0.0
    %64 = vmatpush1.msra.mxu0 0.0
    %65 = vmatprep.subr.mxu0 0.0
    %66 = vmatpush1.msra.mxu0 0.0
    %67 = vmatprep.subr.mxu0 0.0
    %68 = vmatpush1.msra.mxu0 %v30
    %69 = vmatprep.subr.mxu0 0.0
    %70 = vmatpush1.msra.mxu0 %v29
    %71 = vmatprep.subr.mxu0 0.0
    %72 = vmatpush1.msra.mxu0 %v28
    %73 = vmatprep.subr.mxu0 0.0
    %74 = vmatpush1.msra.mxu0 %v27
    %75 = vmatprep.subr.mxu0 0.0
    %76 = vmatpush2.msra.mxu0 0.0
    %77 = vmatprep.subr.mxu0 0.0
    %78 = vmatpush2.msra.mxu0 0.0
    %79 = vmatprep.subr.mxu0 0.0
    %80 = vmatpush2.msra.mxu0 0.0
    %81 = vmatprep.subr.mxu0 0.0
    %82 = vmatpush2.msra.mxu0 0.0
    %83 = vmatprep.subr.mxu0 0.0
    %84 = vmatpush2.msra.mxu0 0.0
    %85 = vmatprep.subr.mxu0 0.0
    %86 = vmatpush2.msra.mxu0 0.0
    %87 = vmatprep.subr.mxu0 0.0
    %88 = vmatpush2.msra.mxu0 0.0
    %89 = vmatprep.subr.mxu0 0.0
    %90 = vmatpush2.msra.mxu0 0.0
    %91 = vmatprep.subr.mxu0 0.0
    %92 = vmatpush2.msra.mxu0 0.0
    %93 = vmatprep.subr.mxu0 0.0
    %94 = vmatpush2.msra.mxu0 0.0
    %95 = vmatprep.subr.mxu0 0.0
    %96 = vmatpush2.msra.mxu0 0.0
    %97 = vmatprep.subr.mxu0 0.0
    %98 = vmatpush2.msra.mxu0 0.0
    %99 = vmatprep.subr.mxu0 0.0
    %100 = vmatpush2.msra.mxu0 0.0
    %101 = vmatprep.subr.mxu0 0.0
    %102 = vmatpush2.msra.mxu0 0.0
    %103 = vmatprep.subr.mxu0 0.0
    %104 = vmatpush2.msra.mxu0 0.0
    %105 = vmatprep.subr.mxu0 0.0
    %106 = vmatpush2.msra.mxu0 0.0
    %107 = vmatprep.mubr.f32.mxu0 0.0
    %108 = vmatmul.mubr.f32.gmra.mxu0 %v38
    %v109 = vpop.f32.mrf.mxu0
    %v110 = vadd.f32 %v35, %v109
    %v111 = vpop.f32.mrf.mxu0
    %112 = vmatprep.mubr.f32.mxu0 0.0
    %113 = vmatmul.mubr.f32.gmra.mxu0 %v41
    %v114 = vpop.f32.mrf.mxu0
    %v115 = vadd.f32 %v35, %v114
    %v116 = vpop.f32.mrf.mxu0
    %117 = vdwg.mxu0
    %v118 = vlaneseq
    %v119 = vand.u32 %v118, 127
    %vm120 = vcmp.ge.s32.totalorder %v119, 0
    %vm121 = vcmp.ge.s32.totalorder %v119, 8
    %vm122 = vcmp.ge.s32.totalorder %v119, 16
    %vm123 = vcmp.ge.s32.totalorder %v119, 24
    %vm124 = vcmp.lt.s32.totalorder %v119, 8
    %vm125 = vcmp.lt.s32.totalorder %v119, 16
    %vm126 = vcmp.lt.s32.totalorder %v119, 24
    %vm127 = vcmp.lt.s32.totalorder %v119, 32
    %vm128 = vmand %vm120, %vm124
    %vm129 = vmand %vm121, %vm125
    %vm130 = vmand %vm122, %vm126
    %vm131 = vmand %vm123, %vm127
    %v132 = vsel %vm128, 1.0, 0.0
    %v133 = vsel %vm129, 1.0, 0.0
    %v134 = vsel %vm130, 1.0, 0.0
    %v135 = vsel %vm131, 1.0, 0.0
    %140 = vrot.lane.b32.xlu0 %v132, 32
    %v141 = vpop.permute.xlu0 %140
    %142 = vrot.lane.b32.xlu0 %v133, 32
    %v143 = vpop.permute.xlu0 %142
    %144 = vrot.lane.b32.xlu0 %v134, 32
    %v145 = vpop.permute.xlu0 %144
    %146 = vrot.lane.b32.xlu0 %v135, 32
    %v147 = vpop.permute.xlu0 %146
    %v152 = vmul.f32 %v110, %v141
    %v153 = vmul.f32 %v110, %v143
    %v154 = vmul.f32 %v110, %v145
    %v155 = vmul.f32 %v110, %v147
    %v156 = vmul.f32 %v115, %v141
    %v157 = vmul.f32 %v115, %v143
    %v158 = vmul.f32 %v115, %v145
    %v159 = vmul.f32 %v115, %v147
    %160 = vrot.lane.b32.xlu0 %v132, 64
    %v161 = vpop.permute.xlu0 %160
    %162 = vrot.lane.b32.xlu0 %v133, 64
    %v163 = vpop.permute.xlu0 %162
    %164 = vrot.lane.b32.xlu0 %v134, 64
    %v165 = vpop.permute.xlu0 %164
    %166 = vrot.lane.b32.xlu0 %v135, 64
    %v167 = vpop.permute.xlu0 %166
    %v172 = vmul.f32 %v110, %v161
    %v173 = vmul.f32 %v110, %v163
    %v174 = vmul.f32 %v110, %v165
    %v175 = vmul.f32 %v110, %v167
    %v176 = vmul.f32 %v115, %v161
    %v177 = vmul.f32 %v115, %v163
    %v178 = vmul.f32 %v115, %v165
    %v179 = vmul.f32 %v115, %v167
    %184 = vrot.lane.b32.xlu0 %v152, 96
    %v185 = vpop.permute.xlu0 %184
    %186 = vrot.lane.b32.xlu0 %v153, 96
    %v187 = vpop.permute.xlu0 %186
    %188 = vrot.lane.b32.xlu0 %v154, 96
    %v189 = vpop.permute.xlu0 %188
    %190 = vrot.lane.b32.xlu0 %v155, 96
    %v191 = vpop.permute.xlu0 %190
    %v193 = vsel %vm36, %v110, 0
    %v195 = vsel %vm36, %v185, 0
    %v197 = vsel %vm36, %v187, 0
    %v199 = vsel %vm36, %v189, 0
    %v201 = vsel %vm36, %v191, 0
    %203 = vmatprep.subr.mxu0 0.0
    %204 = vmatpush1.xpose.msra.mxu0 0.0
    %205 = vmatprep.subr.mxu0 0.0
    %206 = vmatpush1.xpose.msra.mxu0 0.0
    %207 = vmatprep.subr.mxu0 0.0
    %208 = vmatpush1.xpose.msra.mxu0 0.0
    %209 = vmatprep.subr.mxu0 0.0
    %210 = vmatpush1.xpose.msra.mxu0 0.0
    %211 = vmatprep.subr.mxu0 0.0
    %212 = vmatpush1.xpose.msra.mxu0 0.0
    %213 = vmatprep.subr.mxu0 0.0
    %214 = vmatpush1.xpose.msra.mxu0 0.0
    %215 = vmatprep.subr.mxu0 0.0
    %216 = vmatpush1.xpose.msra.mxu0 0.0
    %217 = vmatprep.subr.mxu0 0.0
    %218 = vmatpush1.xpose.msra.mxu0 0.0
    %219 = vmatprep.subr.mxu0 0.0
    %220 = vmatpush1.xpose.msra.mxu0 0.0
    %221 = vmatprep.subr.mxu0 0.0
    %222 = vmatpush1.xpose.msra.mxu0 0.0
    %223 = vmatprep.subr.mxu0 0.0
    %224 = vmatpush1.xpose.msra.mxu0 0.0
    %225 = vmatprep.subr.mxu0 0.0
    %226 = vmatpush1.xpose.msra.mxu0 0.0
    %227 = vmatprep.subr.mxu0 0.0
    %228 = vmatpush1.xpose.msra.mxu0 %v201
    %229 = vmatprep.subr.mxu0 0.0
    %230 = vmatpush1.xpose.msra.mxu0 %v199
    %231 = vmatprep.subr.mxu0 0.0
    %232 = vmatpush1.xpose.msra.mxu0 %v197
    %233 = vmatprep.subr.mxu0 0.0
    %234 = vmatpush1.xpose.msra.mxu0 %v195
    %235 = vmatprep.subr.mxu0 0.0
    %236 = vmatpush2.xpose.msra.mxu0 0.0
    %237 = vmatprep.subr.mxu0 0.0
    %238 = vmatpush2.xpose.msra.mxu0 0.0
    %239 = vmatprep.subr.mxu0 0.0
    %240 = vmatpush2.xpose.msra.mxu0 0.0
    %241 = vmatprep.subr.mxu0 0.0
    %242 = vmatpush2.xpose.msra.mxu0 0.0
    %243 = vmatprep.subr.mxu0 0.0
    %244 = vmatpush2.xpose.msra.mxu0 0.0
    %245 = vmatprep.subr.mxu0 0.0
    %246 = vmatpush2.xpose.msra.mxu0 0.0
    %247 = vmatprep.subr.mxu0 0.0
    %248 = vmatpush2.xpose.msra.mxu0 0.0
    %249 = vmatprep.subr.mxu0 0.0
    %250 = vmatpush2.xpose.msra.mxu0 0.0
    %251 = vmatprep.subr.mxu0 0.0
    %252 = vmatpush2.xpose.msra.mxu0 0.0
    %253 = vmatprep.subr.mxu0 0.0
    %254 = vmatpush2.xpose.msra.mxu0 0.0
    %255 = vmatprep.subr.mxu0 0.0
    %256 = vmatpush2.xpose.msra.mxu0 0.0
    %257 = vmatprep.subr.mxu0 0.0
    %258 = vmatpush2.xpose.msra.mxu0 0.0
    %259 = vmatprep.subr.mxu0 0.0
    %260 = vmatpush2.xpose.msra.mxu0 0.0
    %261 = vmatprep.subr.mxu0 0.0
    %262 = vmatpush2.xpose.msra.mxu0 0.0
    %263 = vmatprep.subr.mxu0 0.0
    %264 = vmatpush2.xpose.msra.mxu0 0.0
    %265 = vmatprep.subr.mxu0 0.0
    %266 = vmatpush2.xpose.msra.mxu0 0.0
    %267 = vmatprep.mubr.f32.mxu0 0.0
    %268 = vmatmul.mubr.f32.gmra.mxu0 %v193
    %v269 = vpop.f32.mrf.mxu0
    %v270 = vadd.f32 0.0, %v269
    %v271 = vpop.f32.mrf.mxu0
    %272 = vdwg.mxu0
    %277 = vrot.lane.b32.xlu0 %v156, 96
    %v278 = vpop.permute.xlu0 %277
    %279 = vrot.lane.b32.xlu0 %v157, 96
    %v280 = vpop.permute.xlu0 %279
    %281 = vrot.lane.b32.xlu0 %v158, 96
    %v282 = vpop.permute.xlu0 %281
    %283 = vrot.lane.b32.xlu0 %v159, 96
    %v284 = vpop.permute.xlu0 %283
    %v286 = vsel %vm36, %v115, 0
    %v288 = vsel %vm36, %v278, 0
    %v290 = vsel %vm36, %v280, 0
    %v292 = vsel %vm36, %v282, 0
    %v294 = vsel %vm36, %v284, 0
    %296 = vmatprep.subr.mxu0 0.0
    %297 = vmatpush1.xpose.msra.mxu0 0.0
    %298 = vmatprep.subr.mxu0 0.0
    %299 = vmatpush1.xpose.msra.mxu0 0.0
    %300 = vmatprep.subr.mxu0 0.0
    %301 = vmatpush1.xpose.msra.mxu0 0.0
    %302 = vmatprep.subr.mxu0 0.0
    %303 = vmatpush1.xpose.msra.mxu0 0.0
    %304 = vmatprep.subr.mxu0 0.0
    %305 = vmatpush1.xpose.msra.mxu0 0.0
    %306 = vmatprep.subr.mxu0 0.0
    %307 = vmatpush1.xpose.msra.mxu0 0.0
    %308 = vmatprep.subr.mxu0 0.0
    %309 = vmatpush1.xpose.msra.mxu0 0.0
    %310 = vmatprep.subr.mxu0 0.0
    %311 = vmatpush1.xpose.msra.mxu0 0.0
    %312 = vmatprep.subr.mxu0 0.0
    %313 = vmatpush1.xpose.msra.mxu0 0.0
    %314 = vmatprep.subr.mxu0 0.0
    %315 = vmatpush1.xpose.msra.mxu0 0.0
    %316 = vmatprep.subr.mxu0 0.0
    %317 = vmatpush1.xpose.msra.mxu0 0.0
    %318 = vmatprep.subr.mxu0 0.0
    %319 = vmatpush1.xpose.msra.mxu0 0.0
    %320 = vmatprep.subr.mxu0 0.0
    %321 = vmatpush1.xpose.msra.mxu0 %v294
    %322 = vmatprep.subr.mxu0 0.0
    %323 = vmatpush1.xpose.msra.mxu0 %v292
    %324 = vmatprep.subr.mxu0 0.0
    %325 = vmatpush1.xpose.msra.mxu0 %v290
    %326 = vmatprep.subr.mxu0 0.0
    %327 = vmatpush1.xpose.msra.mxu0 %v288
    %328 = vmatprep.subr.mxu0 0.0
    %329 = vmatpush2.xpose.msra.mxu0 0.0
    %330 = vmatprep.subr.mxu0 0.0
    %331 = vmatpush2.xpose.msra.mxu0 0.0
    %332 = vmatprep.subr.mxu0 0.0
    %333 = vmatpush2.xpose.msra.mxu0 0.0
    %334 = vmatprep.subr.mxu0 0.0
    %335 = vmatpush2.xpose.msra.mxu0 0.0
    %336 = vmatprep.subr.mxu0 0.0
    %337 = vmatpush2.xpose.msra.mxu0 0.0
    %338 = vmatprep.subr.mxu0 0.0
    %339 = vmatpush2.xpose.msra.mxu0 0.0
    %340 = vmatprep.subr.mxu0 0.0
    %341 = vmatpush2.xpose.msra.mxu0 0.0
    %342 = vmatprep.subr.mxu0 0.0
    %343 = vmatpush2.xpose.msra.mxu0 0.0
    %344 = vmatprep.subr.mxu0 0.0
    %345 = vmatpush2.xpose.msra.mxu0 0.0
    %346 = vmatprep.subr.mxu0 0.0
    %347 = vmatpush2.xpose.msra.mxu0 0.0
    %348 = vmatprep.subr.mxu0 0.0
    %349 = vmatpush2.xpose.msra.mxu0 0.0
    %350 = vmatprep.subr.mxu0 0.0
    %351 = vmatpush2.xpose.msra.mxu0 0.0
    %352 = vmatprep.subr.mxu0 0.0
    %353 = vmatpush2.xpose.msra.mxu0 0.0
    %354 = vmatprep.subr.mxu0 0.0
    %355 = vmatpush2.xpose.msra.mxu0 0.0
    %356 = vmatprep.subr.mxu0 0.0
    %357 = vmatpush2.xpose.msra.mxu0 0.0
    %358 = vmatprep.subr.mxu0 0.0
    %359 = vmatpush2.xpose.msra.mxu0 0.0
    %360 = vmatprep.mubr.f32.mxu0 0.0
    %361 = vmatmul.mubr.f32.gmra.mxu0 %v286
    %v362 = vpop.f32.mrf.mxu0
    %v363 = vadd.f32 0.0, %v362
    %v364 = vpop.f32.mrf.mxu0
    %365 = vdwg.mxu0
    %367 = vrot.lane.b32.xlu0 %v26, 8
    %v368 = vpop.permute.xlu0 %367
    %370 = vrot.lane.b32.xlu0 %v26, 16
    %v371 = vpop.permute.xlu0 %370
    %373 = vrot.lane.b32.xlu0 %v26, 24
    %v374 = vpop.permute.xlu0 %373
    %vm376 = vcmask 64512
    %v377 = vsel %vm376, %v26, %v368
    %vm378 = vcmask 130048
    %v379 = vsel %vm378, %v377, %v371
    %vm380 = vcmask 195584
    %v381 = vsel %vm380, %v379, %v374
    %v382 = vmul.f32 %v270, 0.35355338
    %v383 = vmul.f32 %v363, 0.35355338
    %v386 = vunpack.c.l.s4 1966171168
    %v387 = vunpack.c.0.s8 %v386
    %v388 = vlaneseq
    %v389 = vshrl.u32 %v388, 7
    %v390 = vsub.s32 %v387, %v389
    %v391 = vrot.slane %v381, %v390
    %v392 = vcombine.high %v391, %v391
    %v394 = vunpack.c.l.s4 1966171168
    %v395 = vunpack.c.0.s8 %v394
    %v396 = vlaneseq
    %v397 = vshrl.u32 %v396, 7
    %v398 = vsub.s32 %v395, %v397
    %v399 = vrot.slane %v391, %v398
    %v401 = vunpack.c.l.s4 1966171168
    %v402 = vunpack.c.0.s8 %v401
    %v403 = vlaneseq
    %v404 = vshrl.u32 %v403, 7
    %v405 = vsub.s32 %v402, %v404
    %v406 = vrot.slane %v392, %v405
    %v407 = vlaneseq
    %v408 = vshrl.u32 %v407, 7
    %v409 = vsub.s32 0, %v408
    %v410 = vrot.slane %v399, %v409
    %v411 = vlaneseq
    %v412 = vshrl.u32 %v411, 7
    %v413 = vsub.s32 0, %v412
    %v414 = vrot.slane %v406, %v413
    %v417 = vadd.f32 %v382, %v410
    %v418 = vadd.f32 %v383, %v414
    %v419 = vsel %vm36, %v417, -inf
    %420 = vmax.xlane.f32.xlu0 %v419
    %v421 = vpop.xlane.xlu0 %420
    %v422 = vsel %vm36, %v418, -inf
    %423 = vmax.xlane.f32.xlu0 %v422
    %v424 = vpop.xlane.xlu0 %423
    %v425 = vsub.f32 %v417, %v421
    %v426 = vsub.f32 %v418, %v424
    %v427 = vmul.f32 %v425, 1.442695
    %v428 = vpow.pop %v427
    %v429 = vmul.f32 %v426, 1.442695
    %v430 = vpow.pop %v429
    %v432 = vsel %vm36, %v428, 0
    %v435 = vsel %vm36, %v430, 0
    %437 = vmatprep.subr.mxu0 0.0
    %438 = vmatpush1.msra.mxu0 0.0
    %439 = vmatprep.subr.mxu0 0.0
    %440 = vmatpush1.msra.mxu0 0.0
    %441 = vmatprep.subr.mxu0 0.0
    %442 = vmatpush1.msra.mxu0 0.0
    %443 = vmatprep.subr.mxu0 0.0
    %444 = vmatpush1.msra.mxu0 0.0
    %445 = vmatprep.subr.mxu0 0.0
    %446 = vmatpush1.msra.mxu0 0.0
    %447 = vmatprep.subr.mxu0 0.0
    %448 = vmatpush1.msra.mxu0 0.0
    %449 = vmatprep.subr.mxu0 0.0
    %450 = vmatpush1.msra.mxu0 0.0
    %451 = vmatprep.subr.mxu0 0.0
    %452 = vmatpush1.msra.mxu0 0.0
    %453 = vmatprep.subr.mxu0 0.0
    %454 = vmatpush1.msra.mxu0 0.0
    %455 = vmatprep.subr.mxu0 0.0
    %456 = vmatpush1.msra.mxu0 0.0
    %457 = vmatprep.subr.mxu0 0.0
    %458 = vmatpush1.msra.mxu0 0.0
    %459 = vmatprep.subr.mxu0 0.0
    %460 = vmatpush1.msra.mxu0 0.0
    %461 = vmatprep.subr.mxu0 0.0
    %462 = vmatpush1.msra.mxu0 %v135
    %463 = vmatprep.subr.mxu0 0.0
    %464 = vmatpush1.msra.mxu0 %v134
    %465 = vmatprep.subr.mxu0 0.0
    %466 = vmatpush1.msra.mxu0 %v133
    %467 = vmatprep.subr.mxu0 0.0
    %468 = vmatpush1.msra.mxu0 %v132
    %469 = vmatprep.subr.mxu0 0.0
    %470 = vmatpush2.msra.mxu0 0.0
    %471 = vmatprep.subr.mxu0 0.0
    %472 = vmatpush2.msra.mxu0 0.0
    %473 = vmatprep.subr.mxu0 0.0
    %474 = vmatpush2.msra.mxu0 0.0
    %475 = vmatprep.subr.mxu0 0.0
    %476 = vmatpush2.msra.mxu0 0.0
    %477 = vmatprep.subr.mxu0 0.0
    %478 = vmatpush2.msra.mxu0 0.0
    %479 = vmatprep.subr.mxu0 0.0
    %480 = vmatpush2.msra.mxu0 0.0
    %481 = vmatprep.subr.mxu0 0.0
    %482 = vmatpush2.msra.mxu0 0.0
    %483 = vmatprep.subr.mxu0 0.0
    %484 = vmatpush2.msra.mxu0 0.0
    %485 = vmatprep.subr.mxu0 0.0
    %486 = vmatpush2.msra.mxu0 0.0
    %487 = vmatprep.subr.mxu0 0.0
    %488 = vmatpush2.msra.mxu0 0.0
    %489 = vmatprep.subr.mxu0 0.0
    %490 = vmatpush2.msra.mxu0 0.0
    %491 = vmatprep.subr.mxu0 0.0
    %492 = vmatpush2.msra.mxu0 0.0
    %493 = vmatprep.subr.mxu0 0.0
    %494 = vmatpush2.msra.mxu0 0.0
    %495 = vmatprep.subr.mxu0 0.0
    %496 = vmatpush2.msra.mxu0 0.0
    %497 = vmatprep.subr.mxu0 0.0
    %498 = vmatpush2.msra.mxu0 0.0
    %499 = vmatprep.subr.mxu0 0.0
    %500 = vmatpush2.msra.mxu0 0.0
    %501 = vmatprep.mubr.f32.mxu0 0.0
    %502 = vmatmul.mubr.f32.gmra.mxu0 %v432
    %v503 = vpop.f32.mrf.mxu0
    %v504 = vadd.f32 0.0, %v503
    %v505 = vpop.f32.mrf.mxu0
    %506 = vmatprep.mubr.f32.mxu0 0.0
    %507 = vmatmul.mubr.f32.gmra.mxu0 %v435
    %v508 = vpop.f32.mrf.mxu0
    %v509 = vadd.f32 0.0, %v508
    %v510 = vpop.f32.mrf.mxu0
    %511 = vdwg.mxu0
    %v512 = vrcp.pop %v504
    %v513 = vrcp.pop %v509
    %v514 = vmul.f32 %v428, %v512
    %v515 = vmul.f32 %v430, %v513
    %520 = vrot.lane.b32.xlu0 %v172, 64
    %v521 = vpop.permute.xlu0 %520
    %522 = vrot.lane.b32.xlu0 %v173, 64
    %v523 = vpop.permute.xlu0 %522
    %524 = vrot.lane.b32.xlu0 %v174, 64
    %v525 = vpop.permute.xlu0 %524
    %526 = vrot.lane.b32.xlu0 %v175, 64
    %v527 = vpop.permute.xlu0 %526
    %v533 = vsel %vm36, %v514, 0
    %535 = vmatprep.subr.mxu0 0.0
    %536 = vmatpush1.msra.mxu0 0.0
    %537 = vmatprep.subr.mxu0 0.0
    %538 = vmatpush1.msra.mxu0 0.0
    %539 = vmatprep.subr.mxu0 0.0
    %540 = vmatpush1.msra.mxu0 0.0
    %541 = vmatprep.subr.mxu0 0.0
    %542 = vmatpush1.msra.mxu0 0.0
    %543 = vmatprep.subr.mxu0 0.0
    %544 = vmatpush1.msra.mxu0 0.0
    %545 = vmatprep.subr.mxu0 0.0
    %546 = vmatpush1.msra.mxu0 0.0
    %547 = vmatprep.subr.mxu0 0.0
    %548 = vmatpush1.msra.mxu0 0.0
    %549 = vmatprep.subr.mxu0 0.0
    %550 = vmatpush1.msra.mxu0 0.0
    %551 = vmatprep.subr.mxu0 0.0
    %552 = vmatpush1.msra.mxu0 0.0
    %553 = vmatprep.subr.mxu0 0.0
    %554 = vmatpush1.msra.mxu0 0.0
    %555 = vmatprep.subr.mxu0 0.0
    %556 = vmatpush1.msra.mxu0 0.0
    %557 = vmatprep.subr.mxu0 0.0
    %558 = vmatpush1.msra.mxu0 0.0
    %559 = vmatprep.subr.mxu0 0.0
    %560 = vmatpush1.msra.mxu0 %v527
    %561 = vmatprep.subr.mxu0 0.0
    %562 = vmatpush1.msra.mxu0 %v525
    %563 = vmatprep.subr.mxu0 0.0
    %564 = vmatpush1.msra.mxu0 %v523
    %565 = vmatprep.subr.mxu0 0.0
    %566 = vmatpush1.msra.mxu0 %v521
    %567 = vmatprep.subr.mxu0 0.0
    %568 = vmatpush2.msra.mxu0 0.0
    %569 = vmatprep.subr.mxu0 0.0
    %570 = vmatpush2.msra.mxu0 0.0
    %571 = vmatprep.subr.mxu0 0.0
    %572 = vmatpush2.msra.mxu0 0.0
    %573 = vmatprep.subr.mxu0 0.0
    %574 = vmatpush2.msra.mxu0 0.0
    %575 = vmatprep.subr.mxu0 0.0
    %576 = vmatpush2.msra.mxu0 0.0
    %577 = vmatprep.subr.mxu0 0.0
    %578 = vmatpush2.msra.mxu0 0.0
    %579 = vmatprep.subr.mxu0 0.0
    %580 = vmatpush2.msra.mxu0 0.0
    %581 = vmatprep.subr.mxu0 0.0
    %582 = vmatpush2.msra.mxu0 0.0
    %583 = vmatprep.subr.mxu0 0.0
    %584 = vmatpush2.msra.mxu0 0.0
    %585 = vmatprep.subr.mxu0 0.0
    %586 = vmatpush2.msra.mxu0 0.0
    %587 = vmatprep.subr.mxu0 0.0
    %588 = vmatpush2.msra.mxu0 0.0
    %589 = vmatprep.subr.mxu0 0.0
    %590 = vmatpush2.msra.mxu0 0.0
    %591 = vmatprep.subr.mxu0 0.0
    %592 = vmatpush2.msra.mxu0 0.0
    %593 = vmatprep.subr.mxu0 0.0
    %594 = vmatpush2.msra.mxu0 0.0
    %595 = vmatprep.subr.mxu0 0.0
    %596 = vmatpush2.msra.mxu0 0.0
    %597 = vmatprep.subr.mxu0 0.0
    %598 = vmatpush2.msra.mxu0 0.0
    %599 = vmatprep.mubr.f32.mxu0 0.0
    %600 = vmatmul.mubr.f32.gmra.mxu0 %v533
    %v601 = vpop.f32.mrf.mxu0
    %v602 = vadd.f32 0.0, %v601
    %v603 = vpop.f32.mrf.mxu0
    %604 = vdwg.mxu0
    %609 = vrot.lane.b32.xlu0 %v176, 64
    %v610 = vpop.permute.xlu0 %609
    %611 = vrot.lane.b32.xlu0 %v177, 64
    %v612 = vpop.permute.xlu0 %611
    %613 = vrot.lane.b32.xlu0 %v178, 64
    %v614 = vpop.permute.xlu0 %613
    %615 = vrot.lane.b32.xlu0 %v179, 64
    %v616 = vpop.permute.xlu0 %615
    %v622 = vsel %vm36, %v515, 0
    %624 = vmatprep.subr.mxu0 0.0
    %625 = vmatpush1.msra.mxu0 0.0
    %626 = vmatprep.subr.mxu0 0.0
    %627 = vmatpush1.msra.mxu0 0.0
    %628 = vmatprep.subr.mxu0 0.0
    %629 = vmatpush1.msra.mxu0 0.0
    %630 = vmatprep.subr.mxu0 0.0
    %631 = vmatpush1.msra.mxu0 0.0
    %632 = vmatprep.subr.mxu0 0.0
    %633 = vmatpush1.msra.mxu0 0.0
    %634 = vmatprep.subr.mxu0 0.0
    %635 = vmatpush1.msra.mxu0 0.0
    %636 = vmatprep.subr.mxu0 0.0
    %637 = vmatpush1.msra.mxu0 0.0
    %638 = vmatprep.subr.mxu0 0.0
    %639 = vmatpush1.msra.mxu0 0.0
    %640 = vmatprep.subr.mxu0 0.0
    %641 = vmatpush1.msra.mxu0 0.0
    %642 = vmatprep.subr.mxu0 0.0
    %643 = vmatpush1.msra.mxu0 0.0
    %644 = vmatprep.subr.mxu0 0.0
    %645 = vmatpush1.msra.mxu0 0.0
    %646 = vmatprep.subr.mxu0 0.0
    %647 = vmatpush1.msra.mxu0 0.0
    %648 = vmatprep.subr.mxu0 0.0
    %649 = vmatpush1.msra.mxu0 %v616
    %650 = vmatprep.subr.mxu0 0.0
    %651 = vmatpush1.msra.mxu0 %v614
    %652 = vmatprep.subr.mxu0 0.0
    %653 = vmatpush1.msra.mxu0 %v612
    %654 = vmatprep.subr.mxu0 0.0
    %655 = vmatpush1.msra.mxu0 %v610
    %656 = vmatprep.subr.mxu0 0.0
    %657 = vmatpush2.msra.mxu0 0.0
    %658 = vmatprep.subr.mxu0 0.0
    %659 = vmatpush2.msra.mxu0 0.0
    %660 = vmatprep.subr.mxu0 0.0
    %661 = vmatpush2.msra.mxu0 0.0
    %662 = vmatprep.subr.mxu0 0.0
    %663 = vmatpush2.msra.mxu0 0.0
    %664 = vmatprep.subr.mxu0 0.0
    %665 = vmatpush2.msra.mxu0 0.0
    %666 = vmatprep.subr.mxu0 0.0
    %667 = vmatpush2.msra.mxu0 0.0
    %668 = vmatprep.subr.mxu0 0.0
    %669 = vmatpush2.msra.mxu0 0.0
    %670 = vmatprep.subr.mxu0 0.0
    %671 = vmatpush2.msra.mxu0 0.0
    %672 = vmatprep.subr.mxu0 0.0
    %673 = vmatpush2.msra.mxu0 0.0
    %674 = vmatprep.subr.mxu0 0.0
    %675 = vmatpush2.msra.mxu0 0.0
    %676 = vmatprep.subr.mxu0 0.0
    %677 = vmatpush2.msra.mxu0 0.0
    %678 = vmatprep.subr.mxu0 0.0
    %679 = vmatpush2.msra.mxu0 0.0
    %680 = vmatprep.subr.mxu0 0.0
    %681 = vmatpush2.msra.mxu0 0.0
    %682 = vmatprep.subr.mxu0 0.0
    %683 = vmatpush2.msra.mxu0 0.0
    %684 = vmatprep.subr.mxu0 0.0
    %685 = vmatpush2.msra.mxu0 0.0
    %686 = vmatprep.subr.mxu0 0.0
    %687 = vmatpush2.msra.mxu0 0.0
    %688 = vmatprep.mubr.f32.mxu0 0.0
    %689 = vmatmul.mubr.f32.gmra.mxu0 %v622
    %v690 = vpop.f32.mrf.mxu0
    %v691 = vadd.f32 0.0, %v690
    %v692 = vpop.f32.mrf.mxu0
    %693 = vdwg.mxu0
    %v694 = vlaneseq
    %v695 = vshrl.u32 %v694, 7
    %v696 = vsub.s32 1, %v695
    %v697 = vrot.slane %v31, %v696
    %702 = vrot.lane.b32.xlu0 %v27, 32
    %v703 = vpop.permute.xlu0 %702
    %704 = vrot.lane.b32.xlu0 %v28, 32
    %v705 = vpop.permute.xlu0 %704
    %706 = vrot.lane.b32.xlu0 %v29, 32
    %v707 = vpop.permute.xlu0 %706
    %708 = vrot.lane.b32.xlu0 %v30, 32
    %v709 = vpop.permute.xlu0 %708
    %v715 = vsel %vm36, %v602, 0
    %v718 = vsel %vm36, %v691, 0
    %720 = vmatprep.subr.mxu0 0.0
    %721 = vmatpush1.msra.mxu0 0.0
    %722 = vmatprep.subr.mxu0 0.0
    %723 = vmatpush1.msra.mxu0 0.0
    %724 = vmatprep.subr.mxu0 0.0
    %725 = vmatpush1.msra.mxu0 0.0
    %726 = vmatprep.subr.mxu0 0.0
    %727 = vmatpush1.msra.mxu0 0.0
    %728 = vmatprep.subr.mxu0 0.0
    %729 = vmatpush1.msra.mxu0 0.0
    %730 = vmatprep.subr.mxu0 0.0
    %731 = vmatpush1.msra.mxu0 0.0
    %732 = vmatprep.subr.mxu0 0.0
    %733 = vmatpush1.msra.mxu0 0.0
    %734 = vmatprep.subr.mxu0 0.0
    %735 = vmatpush1.msra.mxu0 0.0
    %736 = vmatprep.subr.mxu0 0.0
    %737 = vmatpush1.msra.mxu0 0.0
    %738 = vmatprep.subr.mxu0 0.0
    %739 = vmatpush1.msra.mxu0 0.0
    %740 = vmatprep.subr.mxu0 0.0
    %741 = vmatpush1.msra.mxu0 0.0
    %742 = vmatprep.subr.mxu0 0.0
    %743 = vmatpush1.msra.mxu0 0.0
    %744 = vmatprep.subr.mxu0 0.0
    %745 = vmatpush1.msra.mxu0 %v709
    %746 = vmatprep.subr.mxu0 0.0
    %747 = vmatpush1.msra.mxu0 %v707
    %748 = vmatprep.subr.mxu0 0.0
    %749 = vmatpush1.msra.mxu0 %v705
    %750 = vmatprep.subr.mxu0 0.0
    %751 = vmatpush1.msra.mxu0 %v703
    %752 = vmatprep.subr.mxu0 0.0
    %753 = vmatpush2.msra.mxu0 0.0
    %754 = vmatprep.subr.mxu0 0.0
    %755 = vmatpush2.msra.mxu0 0.0
    %756 = vmatprep.subr.mxu0 0.0
    %757 = vmatpush2.msra.mxu0 0.0
    %758 = vmatprep.subr.mxu0 0.0
    %759 = vmatpush2.msra.mxu0 0.0
    %760 = vmatprep.subr.mxu0 0.0
    %761 = vmatpush2.msra.mxu0 0.0
    %762 = vmatprep.subr.mxu0 0.0
    %763 = vmatpush2.msra.mxu0 0.0
    %764 = vmatprep.subr.mxu0 0.0
    %765 = vmatpush2.msra.mxu0 0.0
    %766 = vmatprep.subr.mxu0 0.0
    %767 = vmatpush2.msra.mxu0 0.0
    %768 = vmatprep.subr.mxu0 0.0
    %769 = vmatpush2.msra.mxu0 0.0
    %770 = vmatprep.subr.mxu0 0.0
    %771 = vmatpush2.msra.mxu0 0.0
    %772 = vmatprep.subr.mxu0 0.0
    %773 = vmatpush2.msra.mxu0 0.0
    %774 = vmatprep.subr.mxu0 0.0
    %775 = vmatpush2.msra.mxu0 0.0
    %776 = vmatprep.subr.mxu0 0.0
    %777 = vmatpush2.msra.mxu0 0.0
    %778 = vmatprep.subr.mxu0 0.0
    %779 = vmatpush2.msra.mxu0 0.0
    %780 = vmatprep.subr.mxu0 0.0
    %781 = vmatpush2.msra.mxu0 0.0
    %782 = vmatprep.subr.mxu0 0.0
    %783 = vmatpush2.msra.mxu0 0.0
    %784 = vmatprep.mubr.f32.mxu0 0.0
    %785 = vmatmul.mubr.f32.gmra.mxu0 %v715
    %v786 = vpop.f32.mrf.mxu0
    %v787 = vadd.f32 %v697, %v786
    %v788 = vpop.f32.mrf.mxu0
    %789 = vmatprep.mubr.f32.mxu0 0.0
    %790 = vmatmul.mubr.f32.gmra.mxu0 %v718
    %v791 = vpop.f32.mrf.mxu0
    %v792 = vadd.f32 %v697, %v791
    %v793 = vpop.f32.mrf.mxu0
    %794 = vdwg.mxu0
    %v795 = vadd.f32 %v787, %v24
    %v796 = vadd.f32 %v792, %v25
    %v797 = vsel %vm36, %v795, 0.0
    %798 = vadd.xlane.f32.xlu0 %v797
    %v799 = vpop.xlane.xlu0 %798
    %v800 = vsel %vm36, %v796, 0.0
    %801 = vadd.xlane.f32.xlu0 %v800
    %v802 = vpop.xlane.xlu0 %801
    %v803 = vrcp.pop 32.0
    %v804 = vmul.f32 %v799, %v803
    %v805 = vmul.f32 %v802, %v803
    %v806 = vsub.f32 %v795, %v804
    %v807 = vsub.f32 %v796, %v805
    %v808 = vmul.f32 %v806, %v806
    %v809 = vmul.f32 %v807, %v807
    %v810 = vsel %vm36, %v808, 0.0
    %811 = vadd.xlane.f32.xlu0 %v810
    %v812 = vpop.xlane.xlu0 %811
    %v813 = vsel %vm36, %v809, 0.0
    %814 = vadd.xlane.f32.xlu0 %v813
    %v815 = vpop.xlane.xlu0 %814
    %v816 = vmul.f32 %v812, %v803
    %v817 = vmul.f32 %v815, %v803
    %v818 = vadd.f32 %v816, 1e-12
    %v819 = vadd.f32 %v817, 1e-12
    %v820 = vrsqrt.pop %v818
    %v821 = vrsqrt.pop %v819
    %v822 = vmul.f32 %v806, %v820
    %v823 = vmul.f32 %v807, %v821
    %v824 = vlaneseq
    %v825 = vshrl.u32 %v824, 7
    %v826 = vsub.s32 2, %v825
    %v827 = vrot.slane %v31, %v826
    %v828 = vmul.f32 %v822, %v827
    %v829 = vmul.f32 %v823, %v827
    %v830 = vlaneseq
    %v831 = vshrl.u32 %v830, 7
    %v832 = vsub.s32 3, %v831
    %v833 = vrot.slane %v31, %v832
    %v834 = vadd.f32 %v828, %v833
    %v835 = vadd.f32 %v829, %v833
    %v836 = vld [vmem:[%s3] sm:$0xff]
    %v837 = vld [vmem:[%s3 + $0x8] sm:$0xff]
    %v838 = vld [vmem:[%s3 + $0x10] sm:$0xff]
    %v839 = vld [vmem:[%s3 + $0x18] sm:$0xff]
    %v840 = vlaneseq
    %v841 = vshrl.u32 %v840, 7
    %v842 = vsub.s32 4, %v841
    %v843 = vrot.slane %v31, %v842
    %v845 = vsel %vm36, %v834, 0
    %v848 = vsel %vm36, %v835, 0
    %850 = vmatprep.subr.mxu0 0.0
    %851 = vmatpush1.msra.mxu0 0.0
    %852 = vmatprep.subr.mxu0 0.0
    %853 = vmatpush1.msra.mxu0 0.0
    %854 = vmatprep.subr.mxu0 0.0
    %855 = vmatpush1.msra.mxu0 0.0
    %856 = vmatprep.subr.mxu0 0.0
    %857 = vmatpush1.msra.mxu0 0.0
    %858 = vmatprep.subr.mxu0 0.0
    %859 = vmatpush1.msra.mxu0 0.0
    %860 = vmatprep.subr.mxu0 0.0
    %861 = vmatpush1.msra.mxu0 0.0
    %862 = vmatprep.subr.mxu0 0.0
    %863 = vmatpush1.msra.mxu0 0.0
    %864 = vmatprep.subr.mxu0 0.0
    %865 = vmatpush1.msra.mxu0 0.0
    %866 = vmatprep.subr.mxu0 0.0
    %867 = vmatpush1.msra.mxu0 0.0
    %868 = vmatprep.subr.mxu0 0.0
    %869 = vmatpush1.msra.mxu0 0.0
    %870 = vmatprep.subr.mxu0 0.0
    %871 = vmatpush1.msra.mxu0 0.0
    %872 = vmatprep.subr.mxu0 0.0
    %873 = vmatpush1.msra.mxu0 0.0
    %874 = vmatprep.subr.mxu0 0.0
    %875 = vmatpush1.msra.mxu0 %v839
    %876 = vmatprep.subr.mxu0 0.0
    %877 = vmatpush1.msra.mxu0 %v838
    %878 = vmatprep.subr.mxu0 0.0
    %879 = vmatpush1.msra.mxu0 %v837
    %880 = vmatprep.subr.mxu0 0.0
    %881 = vmatpush1.msra.mxu0 %v836
    %882 = vmatprep.subr.mxu0 0.0
    %883 = vmatpush2.msra.mxu0 0.0
    %884 = vmatprep.subr.mxu0 0.0
    %885 = vmatpush2.msra.mxu0 0.0
    %886 = vmatprep.subr.mxu0 0.0
    %887 = vmatpush2.msra.mxu0 0.0
    %888 = vmatprep.subr.mxu0 0.0
    %889 = vmatpush2.msra.mxu0 0.0
    %890 = vmatprep.subr.mxu0 0.0
    %891 = vmatpush2.msra.mxu0 0.0
    %892 = vmatprep.subr.mxu0 0.0
    %893 = vmatpush2.msra.mxu0 0.0
    %894 = vmatprep.subr.mxu0 0.0
    %895 = vmatpush2.msra.mxu0 0.0
    %896 = vmatprep.subr.mxu0 0.0
    %897 = vmatpush2.msra.mxu0 0.0
    %898 = vmatprep.subr.mxu0 0.0
    %899 = vmatpush2.msra.mxu0 0.0
    %900 = vmatprep.subr.mxu0 0.0
    %901 = vmatpush2.msra.mxu0 0.0
    %902 = vmatprep.subr.mxu0 0.0
    %903 = vmatpush2.msra.mxu0 0.0
    %904 = vmatprep.subr.mxu0 0.0
    %905 = vmatpush2.msra.mxu0 0.0
    %906 = vmatprep.subr.mxu0 0.0
    %907 = vmatpush2.msra.mxu0 0.0
    %908 = vmatprep.subr.mxu0 0.0
    %909 = vmatpush2.msra.mxu0 0.0
    %910 = vmatprep.subr.mxu0 0.0
    %911 = vmatpush2.msra.mxu0 0.0
    %912 = vmatprep.subr.mxu0 0.0
    %913 = vmatpush2.msra.mxu0 0.0
    %914 = vmatprep.mubr.f32.mxu0 0.0
    %915 = vmatmul.mubr.f32.gmra.mxu0 %v845
    %v916 = vpop.f32.mrf.mxu0
    %v917 = vadd.f32 %v843, %v916
    %v918 = vpop.f32.mrf.mxu0
    %919 = vmatprep.mubr.f32.mxu0 0.0
    %920 = vmatmul.mubr.f32.gmra.mxu0 %v848
    %v921 = vpop.f32.mrf.mxu0
    %v922 = vadd.f32 %v843, %v921
    %v923 = vpop.f32.mrf.mxu0
    %924 = vdwg.mxu0
    %v925 = vmul.f32 %v917, 0.5
    %v926 = vmul.f32 %v922, 0.5
    %v927 = vmul.f32 %v917, 0.70710677
    %v928 = vmul.f32 %v922, 0.70710677
    %v929 = verf.f32.pop %v927
    %v930 = verf.f32.pop %v928
    %v931 = vadd.f32 %v929, 1.0
    %v932 = vadd.f32 %v930, 1.0
    %v933 = vmul.f32 %v925, %v931
    %v934 = vmul.f32 %v926, %v932
    %v935 = vld [vmem:[%s4] sm:$0xff]
    %v936 = vld [vmem:[%s4 + $0x8] sm:$0xff]
    %v937 = vld [vmem:[%s4 + $0x10] sm:$0xff]
    %v938 = vld [vmem:[%s4 + $0x18] sm:$0xff]
    %v939 = vld [vmem:[%s4 + $0x20] sm:$0xff]
    %v940 = vld [vmem:[%s4 + $0x28] sm:$0xff]
    %v941 = vld [vmem:[%s4 + $0x30] sm:$0xff]
    %v942 = vld [vmem:[%s4 + $0x38] sm:$0xff]
    %v943 = vlaneseq
    %v944 = vshrl.u32 %v943, 7
    %v945 = vsub.s32 5, %v944
    %v946 = vrot.slane %v31, %v945
    %vm947 = vcmask 523264
    %v949 = vsel %vm947, %v933, 0
    %v952 = vsel %vm947, %v934, 0
    %954 = vmatprep.subr.mxu0 0.0
    %955 = vmatpush1.msra.mxu0 0.0
    %956 = vmatprep.subr.mxu0 0.0
    %957 = vmatpush1.msra.mxu0 0.0
    %958 = vmatprep.subr.mxu0 0.0
    %959 = vmatpush1.msra.mxu0 0.0
    %960 = vmatprep.subr.mxu0 0.0
    %961 = vmatpush1.msra.mxu0 0.0
    %962 = vmatprep.subr.mxu0 0.0
    %963 = vmatpush1.msra.mxu0 0.0
    %964 = vmatprep.subr.mxu0 0.0
    %965 = vmatpush1.msra.mxu0 0.0
    %966 = vmatprep.subr.mxu0 0.0
    %967 = vmatpush1.msra.mxu0 0.0
    %968 = vmatprep.subr.mxu0 0.0
    %969 = vmatpush1.msra.mxu0 0.0
    %970 = vmatprep.subr.mxu0 0.0
    %971 = vmatpush1.msra.mxu0 %v942
    %972 = vmatprep.subr.mxu0 0.0
    %973 = vmatpush1.msra.mxu0 %v941
    %974 = vmatprep.subr.mxu0 0.0
    %975 = vmatpush1.msra.mxu0 %v940
    %976 = vmatprep.subr.mxu0 0.0
    %977 = vmatpush1.msra.mxu0 %v939
    %978 = vmatprep.subr.mxu0 0.0
    %979 = vmatpush1.msra.mxu0 %v938
    %980 = vmatprep.subr.mxu0 0.0
    %981 = vmatpush1.msra.mxu0 %v937
    %982 = vmatprep.subr.mxu0 0.0
    %983 = vmatpush1.msra.mxu0 %v936
    %984 = vmatprep.subr.mxu0 0.0
    %985 = vmatpush1.msra.mxu0 %v935
    %986 = vmatprep.subr.mxu0 0.0
    %987 = vmatpush2.msra.mxu0 0.0
    %988 = vmatprep.subr.mxu0 0.0
    %989 = vmatpush2.msra.mxu0 0.0
    %990 = vmatprep.subr.mxu0 0.0
    %991 = vmatpush2.msra.mxu0 0.0
    %992 = vmatprep.subr.mxu0 0.0
    %993 = vmatpush2.msra.mxu0 0.0
    %994 = vmatprep.subr.mxu0 0.0
    %995 = vmatpush2.msra.mxu0 0.0
    %996 = vmatprep.subr.mxu0 0.0
    %997 = vmatpush2.msra.mxu0 0.0
    %998 = vmatprep.subr.mxu0 0.0
    %999 = vmatpush2.msra.mxu0 0.0
    %1000 = vmatprep.subr.mxu0 0.0
    %1001 = vmatpush2.msra.mxu0 0.0
    %1002 = vmatprep.subr.mxu0 0.0
    %1003 = vmatpush2.msra.mxu0 0.0
    %1004 = vmatprep.subr.mxu0 0.0
    %1005 = vmatpush2.msra.mxu0 0.0
    %1006 = vmatprep.subr.mxu0 0.0
    %1007 = vmatpush2.msra.mxu0 0.0
    %1008 = vmatprep.subr.mxu0 0.0
    %1009 = vmatpush2.msra.mxu0 0.0
    %1010 = vmatprep.subr.mxu0 0.0
    %1011 = vmatpush2.msra.mxu0 0.0
    %1012 = vmatprep.subr.mxu0 0.0
    %1013 = vmatpush2.msra.mxu0 0.0
    %1014 = vmatprep.subr.mxu0 0.0
    %1015 = vmatpush2.msra.mxu0 0.0
    %1016 = vmatprep.subr.mxu0 0.0
    %1017 = vmatpush2.msra.mxu0 0.0
    %1018 = vmatprep.mubr.f32.mxu0 0.0
    %1019 = vmatmul.mubr.f32.gmra.mxu0 %v949
    %v1020 = vpop.f32.mrf.mxu0
    %v1021 = vadd.f32 %v946, %v1020
    %v1022 = vpop.f32.mrf.mxu0
    %1023 = vmatprep.mubr.f32.mxu0 0.0
    %1024 = vmatmul.mubr.f32.gmra.mxu0 %v952
    %v1025 = vpop.f32.mrf.mxu0
    %v1026 = vadd.f32 %v946, %v1025
    %v1027 = vpop.f32.mrf.mxu0
    %1028 = vdwg.mxu0
    %v1029 = vadd.f32 %v1021, %v834
    %v1030 = vadd.f32 %v1026, %v835
    %v1031 = vsel %vm36, %v1029, 0.0
    %1032 = vadd.xlane.f32.xlu0 %v1031
    %v1033 = vpop.xlane.xlu0 %1032
    %v1034 = vsel %vm36, %v1030, 0.0
    %1035 = vadd.xlane.f32.xlu0 %v1034
    %v1036 = vpop.xlane.xlu0 %1035
    %v1037 = vmul.f32 %v1033, %v803
    %v1038 = vmul.f32 %v1036, %v803
    %v1039 = vsub.f32 %v1029, %v1037
    %v1040 = vsub.f32 %v1030, %v1038
    %v1041 = vmul.f32 %v1039, %v1039
    %v1042 = vmul.f32 %v1040, %v1040
    %v1043 = vsel %vm36, %v1041, 0.0
    %1044 = vadd.xlane.f32.xlu0 %v1043
    %v1045 = vpop.xlane.xlu0 %1044
    %v1046 = vsel %vm36, %v1042, 0.0
    %1047 = vadd.xlane.f32.xlu0 %v1046
    %v1048 = vpop.xlane.xlu0 %1047
    %v1049 = vmul.f32 %v1045, %v803
    %v1050 = vmul.f32 %v1048, %v803
    %v1051 = vadd.f32 %v1049, 1e-12
    %v1052 = vadd.f32 %v1050, 1e-12
    %v1053 = vrsqrt.pop %v1051
    %v1054 = vrsqrt.pop %v1052
    %v1055 = vmul.f32 %v1039, %v1053
    %v1056 = vmul.f32 %v1040, %v1054
    %v1057 = vlaneseq
    %v1058 = vshrl.u32 %v1057, 7
    %v1059 = vsub.s32 6, %v1058
    %v1060 = vrot.slane %v31, %v1059
    %v1061 = vmul.f32 %v1055, %v1060
    %v1062 = vmul.f32 %v1056, %v1060
    %v1063 = vlaneseq
    %v1064 = vshrl.u32 %v1063, 7
    %v1065 = vsub.s32 7, %v1064
    %v1066 = vrot.slane %v31, %v1065
    %v1067 = vadd.f32 %v1061, %v1066
    %v1068 = vadd.f32 %v1062, %v1066
    %1071 = vrot.lane.b32.xlu0 %v1067, 32
    %v1072 = vpop.permute.xlu0 %1071
    %1073 = vrot.lane.b32.xlu0 %v1068, 32
    %v1074 = vpop.permute.xlu0 %1073
    %1079 = vrot.lane.b32.xlu0 %v1021, 64
    %v1080 = vpop.permute.xlu0 %1079
    %1081 = vrot.lane.b32.xlu0 %v1026, 64
    %v1082 = vpop.permute.xlu0 %1081
    %1087 = vrot.lane.b32.xlu0 %v270, 96
    %v1088 = vpop.permute.xlu0 %1087
    %1089 = vrot.lane.b32.xlu0 %v363, 96
    %v1090 = vpop.permute.xlu0 %1089
    %v1093 = vsel %vm36, %v834, %v1072
    %v1094 = vsel %vm36, %v835, %v1074
    %v1095 = vsel %vm947, %v1093, %v1080
    %v1096 = vsel %vm947, %v1094, %v1082
    %vm1097 = vcmask 785408
    %v1098 = vsel %vm1097, %v1095, %v1088
    %v1099 = vsel %vm1097, %v1096, %v1090
    %v1100 = vsel %vm36, %v514, 0.0
    %v1101 = vsel %vm36, %v515, 0.0
    %1102 = vst [vmem:[#allocation2] sm:$0xff] %v1098
    %1103 = vst [vmem:[#allocation2 + $0x8] sm:$0xff] %v1100
    %1104 = vst [vmem:[#allocation2 + $0x10] sm:$0xff] %v1099
    %1105 = vst [vmem:[#allocation2 + $0x18] sm:$0xff] %v1101
    // Predicated region
    $region26: #{tpu_custom_call.1} parent=1 // pred_check
      _
    $region27: #{tpu_custom_call.1} parent=1 // pred_check_branch
      %1107 = sbr.rel (0) target = $region29
    $region28: #{tpu_custom_call.1} parent=1 // pred_region
      %s1109 = ssub.s32 512, 512
      %1110 = vsyncadd [#allocation3], %s1109
      %s1111 = sshll.u32 [#allocation2], 4
      %s1112 = int_to_ptr.vmem [resolvable:$true] %s1111
      %1117 = dma.vmem_to_hbm [thread:$0]  %s1112, 512, %s6, [#allocation3], 256, 256, 16
    $region29: #{tpu_custom_call.1} parent=1 // pred_fallthru
      _
    // Predicated region
    $region30: #{tpu_custom_call.1} parent=1 // pred_check
      _
    $region31: #{tpu_custom_call.1} parent=1 // pred_check_branch
      %1119 = sbr.rel (0) target = $region33
    $region32: #{tpu_custom_call.1} parent=1 // pred_region
      %1120 = dma.done [#allocation3], 512
    $region33: #{tpu_custom_call.1} parent=1 // pred_fallthru
      _
    %1121 = vsyncpa [#allocation3], 1

</llo_original>
